<compile_context>
chip_gen: v5e
topology: v5e:2x2
jax: 0.10.0
libtpu: 0.0.40
codegen_flags: <defaults>
</compile_context>

<pallas_src>
import functools

import jax
import jax.numpy as jnp
from jax.experimental import pallas as pl
from jax.experimental.pallas import tpu as pltpu


# ---------------------------------------------------------------------------
# Kernels
# ---------------------------------------------------------------------------

def _fused_kernel(xl_ref, xg_ref,
                  w1l_ref, w1g_ref, b1_ref,
                  wl_ref, bl_ref,
                  wg_ref, bg_ref,
                  ol_ref, og_ref):
    """Single pass: one batch element per grid step, whole image resident.

    xl_ref : (Cl, HW)   local branch          xg_ref : (Cg, HW)  global branch
    w1l/w1g: (Ch, Cl/Cg) conv1 weight slices, PRE-SCALED by 1/HW_true
    b1     : (Ch, 1)
    wl/wg  : (Cl/Cg, Ch) conv_a2l / conv_a2g weights,  bl/bg : (Cl/Cg, 1)
    """
    # AdaptiveAvgPool2d((1,1)): lane reduction in f32; 1/HW is in the weights.
    sum_l = jnp.sum(xl_ref[...], axis=-1, keepdims=True, dtype=jnp.float32)
    sum_g = jnp.sum(xg_ref[...], axis=-1, keepdims=True, dtype=jnp.float32)

    # conv1 (1x1) + ReLU, split-weight form (avoids a cross-lane concat).
    h = (jnp.dot(w1l_ref[...], sum_l, preferred_element_type=jnp.float32)
         + jnp.dot(w1g_ref[...], sum_g, preferred_element_type=jnp.float32)
         + b1_ref[...])
    h = jnp.maximum(h, 0.0)

    # conv_a2l / conv_a2g (1x1) + sigmoid -> per-channel gate columns.
    gate_l = jax.nn.sigmoid(
        jnp.dot(wl_ref[...], h, preferred_element_type=jnp.float32) + bl_ref[...])
    gate_g = jax.nn.sigmoid(
        jnp.dot(wg_ref[...], h, preferred_element_type=jnp.float32) + bg_ref[...])

    # Excite: column broadcast across lanes, multiply in the input dtype.
    ol_ref[...] = (xl_ref[...] * gate_l.astype(xl_ref.dtype)).astype(ol_ref.dtype)
    og_ref[...] = (xg_ref[...] * gate_g.astype(xg_ref.dtype)).astype(og_ref.dtype)


def _pool_gate_kernel(xl_ref, xg_ref,
                      w1l_ref, w1g_ref, b1_ref,
                      wl_ref, bl_ref,
                      wg_ref, bg_ref,
                      gl_ref, gg_ref,
                      sl_ref, sg_ref):
    """Two-phase, phase 1: accumulate pooled sums over HW tiles, emit gates.

    Grid = (B, T) with the HW-tile axis 'arbitrary'.  sl/sg are (C, 1) f32
    VMEM accumulators; gl/gg are (B, C, 1) f32 gate outputs, written once on
    the last tile of each batch element (output block is resident across T).
    """
    t = pl.program_id(1)

    @pl.when(t == 0)
    def _init():
        sl_ref[...] = jnp.zeros_like(sl_ref)
        sg_ref[...] = jnp.zeros_like(sg_ref)

    sl_ref[...] += jnp.sum(xl_ref[...], axis=-1, keepdims=True, dtype=jnp.float32)
    sg_ref[...] += jnp.sum(xg_ref[...], axis=-1, keepdims=True, dtype=jnp.float32)

    @pl.when(t == pl.num_programs(1) - 1)
    def _finalize():
        h = (jnp.dot(w1l_ref[...], sl_ref[...], preferred_element_type=jnp.float32)
             + jnp.dot(w1g_ref[...], sg_ref[...], preferred_element_type=jnp.float32)
             + b1_ref[...])
        h = jnp.maximum(h, 0.0)
        gl_ref[...] = jax.nn.sigmoid(
            jnp.dot(wl_ref[...], h, preferred_element_type=jnp.float32) + bl_ref[...])
        gg_ref[...] = jax.nn.sigmoid(
            jnp.dot(wg_ref[...], h, preferred_element_type=jnp.float32) + bg_ref[...])


def _excite_kernel(xl_ref, xg_ref, gl_ref, gg_ref, ol_ref, og_ref):
    """Two-phase, phase 2: lane-dense (C, hw_tile) excite, fully parallel grid."""
    ol_ref[...] = (xl_ref[...] * gl_ref[...].astype(xl_ref.dtype)).astype(ol_ref.dtype)
    og_ref[...] = (xg_ref[...] * gg_ref[...].astype(xg_ref.dtype)).astype(og_ref.dtype)


# ---------------------------------------------------------------------------
# Wrapper
# ---------------------------------------------------------------------------

def _vmem_budget_bytes():
    """~7/8 of this generation's physical VMEM (≈112 MiB v5e/v6e, ≈56 MiB v7x)."""
    try:
        cap = int(getattr(pltpu.get_tpu_info(), "vmem_capacity_bytes", 0)) or (64 << 20)
    except Exception:
        cap = 64 << 20  # conservative (v7x-sized) fallback
    return (cap * 7) // 8


def _pick_hw_tile(hw_pad, budget_bytes, per_lane_bytes):
    """Largest multiple-of-128 tile that divides hw_pad and fits the budget."""
    m = hw_pad // 128
    k_budget = max(1, budget_bytes // (per_lane_bytes * 128))
    k_max = max(1, min(m, k_budget))
    for k in range(k_max, 0, -1):
        if m % k == 0:
            return 128 * k
    return 128


def ffcse_block_pallas(id_l, id_g, params, *, force_two_phase=False,
                       hw_tile=None, donate_inputs=False):
    """id_l: (B, Cl, H, W), id_g: (B, Cg, H, W) in NCHW (PyTorch convention)."""
    B, Cl, H, W = id_l.shape
    _, Cg, _, _ = id_g.shape
    HW = H * W
    Ch = params["w1l"].shape[0]
    itemsize = jnp.dtype(id_l.dtype).itemsize

    # TODO(synk): degenerate in_cl == 0 / in_cg == 0 (conv_a2l / conv_a2g is
    # None; that branch returns literal 0 in the PyTorch module) is unsupported.

    # Fold AdaptiveAvgPool's 1/HW into the conv1 weights (TRUE HW, so the
    # zero-padded lanes added below do not change the mean).
    inv_hw = 1.0 / float(HW)
    w_dt = params["w1l"].dtype
    w1l = (params["w1l"].astype(jnp.float32) * inv_hw).astype(w_dt)
    w1g = (params["w1g"].astype(jnp.float32) * inv_hw).astype(w_dt)
    b1, wl, bl, wg, bg = (params["b1"], params["wl"], params["bl"],
                          params["wg"], params["bg"])

    # NCHW -> (B, C, HW): pure reshape on contiguous layouts.  Pad the lane
    # axis to a multiple of 128 so excite stores are unmasked vst.
    HW_pad = ((HW + 127) // 128) * 128
    xl = id_l.reshape(B, Cl, HW)
    xg = id_g.reshape(B, Cg, HW)
    if HW_pad != HW:
        pad = ((0, 0), (0, 0), (0, HW_pad - HW))
        xl = jnp.pad(xl, pad)
        xg = jnp.pad(xg, pad)

    budget = int(_vmem_budget_bytes())
    # Fused path holds (in + out) x double-buffered x both branches per step.
    fused_step_bytes = 4 * (Cl + Cg) * HW_pad * itemsize
    use_fused = (not force_two_phase) and fused_step_bytes <= budget

    def _cparams(sem):
        return pltpu.CompilerParams(dimension_semantics=sem,
                                    vmem_limit_bytes=budget)

    aliases = {0: 0, 1: 1} if donate_inputs else {}

    if use_fused:
        # ------------------------------------------------------------------
        # Fused single pass: grid over batch, whole (C, HW) image resident.
        # ------------------------------------------------------------------
        img = lambda c: pl.BlockSpec((pl.Squeezed(), c, HW_pad), lambda b: (b, 0, 0))
        cst = lambda r, c: pl.BlockSpec((r, c), lambda b: (0, 0))

        # TODO(synk): on v7x a batch-only parallel grid idles one TensorCore
        # when B == 1; callers can set force_two_phase=True to get the fully
        # parallel (B, HW_tiles) excite grid instead.
        out_l, out_g = pl.pallas_call(
            _fused_kernel,
            out_shape=(jax.ShapeDtypeStruct((B, Cl, HW_pad), id_l.dtype),
                       jax.ShapeDtypeStruct((B, Cg, HW_pad), id_g.dtype)),
            grid_spec=pltpu.PrefetchScalarGridSpec(
                num_scalar_prefetch=0,
                grid=(B,),
                in_specs=[img(Cl), img(Cg),
                          cst(Ch, Cl), cst(Ch, Cg), cst(Ch, 1),
                          cst(Cl, Ch), cst(Cl, 1),
                          cst(Cg, Ch), cst(Cg, 1)],
                out_specs=[img(Cl), img(Cg)],
            ),
            compiler_params=_cparams(("parallel",)),
            input_output_aliases=aliases,
        )(xl, xg, w1l, w1g, b1, wl, bl, wg, bg)
    else:
        # ------------------------------------------------------------------
        # Two-phase HW-tiled fallback.
        # ------------------------------------------------------------------
        if hw_tile is None:
            hw_tile = _pick_hw_tile(HW_pad, budget, 4 * (Cl + Cg) * itemsize)
        assert hw_tile % 128 == 0 and HW_pad % hw_tile == 0, (hw_tile, HW_pad)
        T = HW_pad // hw_tile

        img = lambda c: pl.BlockSpec((pl.Squeezed(), c, hw_tile),
                                     lambda b, t: (b, 0, t))
        gate = lambda c: pl.BlockSpec((pl.Squeezed(), c, 1),
                                      lambda b, t: (b, 0, 0))
        cst = lambda r, c: pl.BlockSpec((r, c), lambda b, t: (0, 0))

        # Phase 1: pooled means + gates (HW axis is a reduction -> arbitrary).
        gl, gg = pl.pallas_call(
            _pool_gate_kernel,
            out_shape=(jax.ShapeDtypeStruct((B, Cl, 1), jnp.float32),
                       jax.ShapeDtypeStruct((B, Cg, 1), jnp.float32)),
            grid_spec=pltpu.PrefetchScalarGridSpec(
                num_scalar_prefetch=0,
                grid=(B, T),
                in_specs=[img(Cl), img(Cg),
                          cst(Ch, Cl), cst(Ch, Cg), cst(Ch, 1),
                          cst(Cl, Ch), cst(Cl, 1),
                          cst(Cg, Ch), cst(Cg, 1)],
                out_specs=[gate(Cl), gate(Cg)],
                scratch_shapes=[pltpu.VMEM((Cl, 1), jnp.float32),
                                pltpu.VMEM((Cg, 1), jnp.float32)],
            ),
            compiler_params=_cparams(("parallel", "arbitrary")),
        )(xl, xg, w1l, w1g, b1, wl, bl, wg, bg)

        # Phase 2: excite over a fully parallel (B, HW_tiles) grid.
        out_l, out_g = pl.pallas_call(
            _excite_kernel,
            out_shape=(jax.ShapeDtypeStruct((B, Cl, HW_pad), id_l.dtype),
                       jax.ShapeDtypeStruct((B, Cg, HW_pad), id_g.dtype)),
            grid_spec=pltpu.PrefetchScalarGridSpec(
                num_scalar_prefetch=0,
                grid=(B, T),
                in_specs=[img(Cl), img(Cg), gate(Cl), gate(Cg)],
                out_specs=[img(Cl), img(Cg)],
            ),
            compiler_params=_cparams(("parallel", "parallel")),
            input_output_aliases=aliases,
        )(xl, xg, gl, gg)

    if HW_pad != HW:
        out_l = out_l[:, :, :HW]
        out_g = out_g[:, :, :HW]
    return out_l.reshape(B, Cl, H, W), out_g.reshape(B, Cg, H, W)


# ---------------------------------------------------------------------------
# Pure-JAX reference and synthetic params
# ---------------------------------------------------------------------------

def ffcse_block_ref(id_l, id_g, params):
    """Pure-JAX reference mirroring the PyTorch forward (NCHW)."""
    x = jnp.concatenate([id_l, id_g], axis=1)                       # (B, C, H, W)
    pooled = jnp.mean(x, axis=(2, 3))                               # (B, C)
    w1 = jnp.concatenate([params["w1l"], params["w1g"]], axis=1)    # (Ch, C)
    h = jnp.maximum(pooled @ w1.T + params["b1"][:, 0], 0.0)        # (B, Ch)
    gl = jax.nn.sigmoid(h @ params["wl"].T + params["bl"][:, 0])    # (B, Cl)
    gg = jax.nn.sigmoid(h @ params["wg"].T + params["bg"][:, 0])    # (B, Cg)
    x_l = id_l * gl[:, :, None, None]
    x_g = id_g * gg[:, :, None, None]
    return x_l, x_g


def make_params(key, channels, ratio_g, dtype=jnp.float32):
    """Deterministic synthetic params matching FFCSE_block.__init__ shapes.

    conv1:    Conv2d(channels, channels//16, kernel_size=1, bias=True)
    conv_a2l: Conv2d(channels//16, in_cl, kernel_size=1, bias=True)
    conv_a2g: Conv2d(channels//16, in_cg, kernel_size=1, bias=True)
    Weights kept in PyTorch (out, in) layout; conv1 pre-split along its input
    channels into local / global slices.  Biases are columns.
    """
    r = 16
    in_cg = int(channels * ratio_g)
    in_cl = channels - in_cg
    ch = channels // r
    assert ch >= 1 and in_cl > 0 and in_cg > 0
    ks = jax.random.split(key, 6)
    p = {
        "w1l": jax.random.normal(ks[0], (ch, in_cl), dtype) * 0.1,
        "w1g": jax.random.normal(ks[0], (ch, in_cg), dtype) * 0.1,
        "b1":  jax.random.normal(ks[1], (ch, 1), dtype) * 0.1,
        "wl":  jax.random.normal(ks[2], (in_cl, ch), dtype) * 0.1,
        "bl":  jax.random.normal(ks[3], (in_cl, 1), dtype) * 0.1,
        "wg":  jax.random.normal(ks[4], (in_cg, ch), dtype) * 0.1,
        "bg":  jax.random.normal(ks[5], (in_cg, 1), dtype) * 0.1,
    }
    return p, in_cl, in_cg


if __name__ == "__main__":
    # Small shapes consistent with the module: channels=32 so channels//16 = 2.
    B, channels, H, W = 2, 32, 16, 16
    ratio_g = 0.5

    key = jax.random.PRNGKey(0)
    k_p, k_l, k_g = jax.random.split(key, 3)
    params, in_cl, in_cg = make_params(k_p, channels, ratio_g)

    id_l = jax.random.normal(k_l, (B, in_cl, H, W), jnp.float32)
    id_g = jax.random.normal(k_g, (B, in_cg, H, W), jnp.float32)

    ref_l, ref_g = ffcse_block_ref(id_l, id_g, params)

    # Fused single-pass path (default when the whole image fits VMEM).
    x_l, x_g = jax.block_until_ready(
        jax.jit(ffcse_block_pallas)(id_l, id_g, params))
    assert jnp.allclose(x_l, ref_l, atol=1e-5, rtol=1e-5)
    assert jnp.allclose(x_g, ref_g, atol=1e-5, rtol=1e-5)

    # Two-phase HW-tiled fallback, exercised explicitly with a small tile so
    # the accumulator / finalize path runs (HW_pad=256 -> 2 tiles of 128).
    two_phase = jax.jit(functools.partial(
        ffcse_block_pallas, force_two_phase=True, hw_tile=128))
    t_l, t_g = jax.block_until_ready(two_phase(id_l, id_g, params))
    assert jnp.allclose(t_l, ref_l, atol=1e-5, rtol=1e-5)
    assert jnp.allclose(t_g, ref_g, atol=1e-5, rtol=1e-5)

    print("KERNEL_OK")
</pallas_src>

<mosaic_0001>
module attributes {stable_mosaic.version = 11 : i64} {
  func.func @_fused_kernel(%arg0: i32, %arg1: memref<1x16x256xf32, #tpu.memory_space<vmem>>, %arg2: memref<1x16x256xf32, #tpu.memory_space<vmem>>, %arg3: memref<2x16xf32, #tpu.memory_space<vmem>>, %arg4: memref<2x16xf32, #tpu.memory_space<vmem>>, %arg5: memref<2x1xf32, #tpu.memory_space<vmem>>, %arg6: memref<16x2xf32, #tpu.memory_space<vmem>>, %arg7: memref<16x1xf32, #tpu.memory_space<vmem>>, %arg8: memref<16x2xf32, #tpu.memory_space<vmem>>, %arg9: memref<16x1xf32, #tpu.memory_space<vmem>>, %arg10: memref<1x16x256xf32, #tpu.memory_space<vmem>>, %arg11: memref<1x16x256xf32, #tpu.memory_space<vmem>>) attributes {dimension_semantics = [#tpu.dimension_semantics<parallel>], iteration_bounds = array<i64: 2>, scalar_prefetch = 0 : i64, scratch_operands = 0 : i64, tpu.core_type = #tpu.core_type<tc>, window_params = [{transform_indices = @transform_0, window_bounds = array<i64: 1, 16, 256>}, {transform_indices = @transform_1, window_bounds = array<i64: 1, 16, 256>}, {pipeline_mode = #tpu.pipeline_mode<synchronous>, transform_indices = @transform_2, window_bounds = array<i64: 2, 16>}, {pipeline_mode = #tpu.pipeline_mode<synchronous>, transform_indices = @transform_3, window_bounds = array<i64: 2, 16>}, {pipeline_mode = #tpu.pipeline_mode<synchronous>, transform_indices = @transform_4, window_bounds = array<i64: 2, 1>}, {pipeline_mode = #tpu.pipeline_mode<synchronous>, transform_indices = @transform_5, window_bounds = array<i64: 16, 2>}, {pipeline_mode = #tpu.pipeline_mode<synchronous>, transform_indices = @transform_6, window_bounds = array<i64: 16, 1>}, {pipeline_mode = #tpu.pipeline_mode<synchronous>, transform_indices = @transform_7, window_bounds = array<i64: 16, 2>}, {pipeline_mode = #tpu.pipeline_mode<synchronous>, transform_indices = @transform_8, window_bounds = array<i64: 16, 1>}, {transform_indices = @transform_9, window_bounds = array<i64: 1, 16, 256>}, {transform_indices = @transform_10, window_bounds = array<i64: 1, 16, 256>}]} {
    %c0 = arith.constant 0 : index
    %c0_0 = arith.constant 0 : index
    %c0_1 = arith.constant 0 : index
    %0 = vector.load %arg1[%c0, %c0_0, %c0_1] : memref<1x16x256xf32, #tpu.memory_space<vmem>>, vector<1x16x256xf32>
    %1 = vector.shape_cast %0 : vector<1x16x256xf32> to vector<16x256xf32>
    %cst = arith.constant dense<0.000000e+00> : vector<16xf32>
    %2 = vector.multi_reduction <add>, %1, %cst [1] : vector<16x256xf32> to vector<16xf32>
    %3 = vector.shape_cast %2 : vector<16xf32> to vector<16x1xf32>
    %c0_2 = arith.constant 0 : index
    %c0_3 = arith.constant 0 : index
    %c0_4 = arith.constant 0 : index
    %4 = vector.load %arg2[%c0_2, %c0_3, %c0_4] : memref<1x16x256xf32, #tpu.memory_space<vmem>>, vector<1x16x256xf32>
    %5 = vector.shape_cast %4 : vector<1x16x256xf32> to vector<16x256xf32>
    %cst_5 = arith.constant dense<0.000000e+00> : vector<16xf32>
    %6 = vector.multi_reduction <add>, %5, %cst_5 [1] : vector<16x256xf32> to vector<16xf32>
    %7 = vector.shape_cast %6 : vector<16xf32> to vector<16x1xf32>
    %c0_6 = arith.constant 0 : index
    %c0_7 = arith.constant 0 : index
    %8 = vector.load %arg3[%c0_6, %c0_7] : memref<2x16xf32, #tpu.memory_space<vmem>>, vector<2x16xf32>
    %cst_8 = arith.constant dense<0.000000e+00> : vector<2x1xf32>
    %9 = tpu.matmul %8, %3, %cst_8 {dimension_numbers = #tpu.dot_dimension_numbers<[1], [0], [0], [1], [0, 0, 1, 1], [], []>} : vector<2x16xf32>, vector<16x1xf32>, vector<2x1xf32> -> vector<2x1xf32>
    %c0_9 = arith.constant 0 : index
    %c0_10 = arith.constant 0 : index
    %10 = vector.load %arg4[%c0_9, %c0_10] : memref<2x16xf32, #tpu.memory_space<vmem>>, vector<2x16xf32>
    %cst_11 = arith.constant dense<0.000000e+00> : vector<2x1xf32>
    %11 = tpu.matmul %10, %7, %cst_11 {dimension_numbers = #tpu.dot_dimension_numbers<[1], [0], [0], [1], [0, 0, 1, 1], [], []>} : vector<2x16xf32>, vector<16x1xf32>, vector<2x1xf32> -> vector<2x1xf32>
    %12 = arith.addf %9, %11 : vector<2x1xf32>
    %c0_12 = arith.constant 0 : index
    %c0_13 = arith.constant 0 : index
    %13 = vector.load %arg5[%c0_12, %c0_13] : memref<2x1xf32, #tpu.memory_space<vmem>>, vector<2x1xf32>
    %14 = arith.addf %12, %13 : vector<2x1xf32>
    %cst_14 = arith.constant 0.000000e+00 : f32
    %15 = vector.broadcast %cst_14 : f32 to vector<2x1xf32>
    %16 = arith.maximumf %14, %15 : vector<2x1xf32>
    %c0_15 = arith.constant 0 : index
    %c0_16 = arith.constant 0 : index
    %17 = vector.load %arg6[%c0_15, %c0_16] : memref<16x2xf32, #tpu.memory_space<vmem>>, vector<16x2xf32>
    %cst_17 = arith.constant dense<0.000000e+00> : vector<16x1xf32>
    %18 = tpu.matmul %17, %16, %cst_17 {dimension_numbers = #tpu.dot_dimension_numbers<[1], [0], [0], [1], [0, 0, 1, 1], [], []>} : vector<16x2xf32>, vector<2x1xf32>, vector<16x1xf32> -> vector<16x1xf32>
    %c0_18 = arith.constant 0 : index
    %c0_19 = arith.constant 0 : index
    %19 = vector.load %arg7[%c0_18, %c0_19] : memref<16x1xf32, #tpu.memory_space<vmem>>, vector<16x1xf32>
    %20 = arith.addf %18, %19 : vector<16x1xf32>
    %21 = arith.negf %20 : vector<16x1xf32>
    %22 = math.exp %21 : vector<16x1xf32>
    %cst_20 = arith.constant 1.000000e+00 : f32
    %23 = vector.broadcast %cst_20 : f32 to vector<16x1xf32>
    %24 = arith.addf %23, %22 : vector<16x1xf32>
    %25 = arith.divf %23, %24 : vector<16x1xf32>
    %c0_21 = arith.constant 0 : index
    %c0_22 = arith.constant 0 : index
    %26 = vector.load %arg8[%c0_21, %c0_22] : memref<16x2xf32, #tpu.memory_space<vmem>>, vector<16x2xf32>
    %cst_23 = arith.constant dense<0.000000e+00> : vector<16x1xf32>
    %27 = tpu.matmul %26, %16, %cst_23 {dimension_numbers = #tpu.dot_dimension_numbers<[1], [0], [0], [1], [0, 0, 1, 1], [], []>} : vector<16x2xf32>, vector<2x1xf32>, vector<16x1xf32> -> vector<16x1xf32>
    %c0_24 = arith.constant 0 : index
    %c0_25 = arith.constant 0 : index
    %28 = vector.load %arg9[%c0_24, %c0_25] : memref<16x1xf32, #tpu.memory_space<vmem>>, vector<16x1xf32>
    %29 = arith.addf %27, %28 : vector<16x1xf32>
    %30 = arith.negf %29 : vector<16x1xf32>
    %31 = math.exp %30 : vector<16x1xf32>
    %cst_26 = arith.constant 1.000000e+00 : f32
    %32 = vector.broadcast %cst_26 : f32 to vector<16x1xf32>
    %33 = arith.addf %32, %31 : vector<16x1xf32>
    %34 = arith.divf %32, %33 : vector<16x1xf32>
    %c0_27 = arith.constant 0 : index
    %c0_28 = arith.constant 0 : index
    %c0_29 = arith.constant 0 : index
    %35 = vector.load %arg1[%c0_27, %c0_28, %c0_29] : memref<1x16x256xf32, #tpu.memory_space<vmem>>, vector<1x16x256xf32>
    %36 = vector.shape_cast %35 : vector<1x16x256xf32> to vector<16x256xf32>
    %37 = vector.broadcast %25 : vector<16x1xf32> to vector<16x256xf32>
    %38 = arith.mulf %36, %37 : vector<16x256xf32>
    %c0_30 = arith.constant 0 : index
    %c0_31 = arith.constant 0 : index
    %c0_32 = arith.constant 0 : index
    %39 = vector.load %arg10[%c0_30, %c0_31, %c0_32] : memref<1x16x256xf32, #tpu.memory_space<vmem>>, vector<1x16x256xf32>
    %40 = vector.shape_cast %39 : vector<1x16x256xf32> to vector<16x256xf32>
    %41 = vector.shape_cast %38 : vector<16x256xf32> to vector<1x16x256xf32>
    tpu.vector_store %arg10[%c0_30, %c0_31, %c0_32], %41 {strides = array<i32>} : memref<1x16x256xf32, #tpu.memory_space<vmem>>, vector<1x16x256xf32>,
    %c0_33 = arith.constant 0 : index
    %c0_34 = arith.constant 0 : index
    %c0_35 = arith.constant 0 : index
    %42 = vector.load %arg2[%c0_33, %c0_34, %c0_35] : memref<1x16x256xf32, #tpu.memory_space<vmem>>, vector<1x16x256xf32>
    %43 = vector.shape_cast %42 : vector<1x16x256xf32> to vector<16x256xf32>
    %44 = vector.broadcast %34 : vector<16x1xf32> to vector<16x256xf32>
    %45 = arith.mulf %43, %44 : vector<16x256xf32>
    %c0_36 = arith.constant 0 : index
    %c0_37 = arith.constant 0 : index
    %c0_38 = arith.constant 0 : index
    %46 = vector.load %arg11[%c0_36, %c0_37, %c0_38] : memref<1x16x256xf32, #tpu.memory_space<vmem>>, vector<1x16x256xf32>
    %47 = vector.shape_cast %46 : vector<1x16x256xf32> to vector<16x256xf32>
    %48 = vector.shape_cast %45 : vector<16x256xf32> to vector<1x16x256xf32>
    tpu.vector_store %arg11[%c0_36, %c0_37, %c0_38], %48 {strides = array<i32>} : memref<1x16x256xf32, #tpu.memory_space<vmem>>, vector<1x16x256xf32>,
    return
  }
  func.func @transform_0(%arg0: i32) -> (i32, i32, i32) {
    %c0_i32 = arith.constant 0 : i32
    %c0_i32_0 = arith.constant 0 : i32
    %c0_i32_1 = arith.constant 0 : i32
    return %arg0, %c0_i32, %c0_i32_0 : i32, i32, i32
  }
  func.func @transform_1(%arg0: i32) -> (i32, i32, i32) {
    %c0_i32 = arith.constant 0 : i32
    %c0_i32_0 = arith.constant 0 : i32
    %c0_i32_1 = arith.constant 0 : i32
    return %arg0, %c0_i32, %c0_i32_0 : i32, i32, i32
  }
  func.func @transform_2(%arg0: i32) -> (i32, i32) {
    %c0_i32 = arith.constant 0 : i32
    %c0_i32_0 = arith.constant 0 : i32
    %c0_i32_1 = arith.constant 0 : i32
    return %c0_i32, %c0_i32_0 : i32, i32
  }
  func.func @transform_3(%arg0: i32) -> (i32, i32) {
    %c0_i32 = arith.constant 0 : i32
    %c0_i32_0 = arith.constant 0 : i32
    %c0_i32_1 = arith.constant 0 : i32
    return %c0_i32, %c0_i32_0 : i32, i32
  }
  func.func @transform_4(%arg0: i32) -> (i32, i32) {
    %c0_i32 = arith.constant 0 : i32
    %c0_i32_0 = arith.constant 0 : i32
    %c0_i32_1 = arith.constant 0 : i32
    return %c0_i32, %c0_i32_0 : i32, i32
  }
  func.func @transform_5(%arg0: i32) -> (i32, i32) {
    %c0_i32 = arith.constant 0 : i32
    %c0_i32_0 = arith.constant 0 : i32
    %c0_i32_1 = arith.constant 0 : i32
    return %c0_i32, %c0_i32_0 : i32, i32
  }
  func.func @transform_6(%arg0: i32) -> (i32, i32) {
    %c0_i32 = arith.constant 0 : i32
    %c0_i32_0 = arith.constant 0 : i32
    %c0_i32_1 = arith.constant 0 : i32
    return %c0_i32, %c0_i32_0 : i32, i32
  }
  func.func @transform_7(%arg0: i32) -> (i32, i32) {
    %c0_i32 = arith.constant 0 : i32
    %c0_i32_0 = arith.constant 0 : i32
    %c0_i32_1 = arith.constant 0 : i32
    return %c0_i32, %c0_i32_0 : i32, i32
  }
  func.func @transform_8(%arg0: i32) -> (i32, i32) {
    %c0_i32 = arith.constant 0 : i32
    %c0_i32_0 = arith.constant 0 : i32
    %c0_i32_1 = arith.constant 0 : i32
    return %c0_i32, %c0_i32_0 : i32, i32
  }
  func.func @transform_9(%arg0: i32) -> (i32, i32, i32) {
    %c0_i32 = arith.constant 0 : i32
    %c0_i32_0 = arith.constant 0 : i32
    %c0_i32_1 = arith.constant 0 : i32
    return %arg0, %c0_i32, %c0_i32_0 : i32, i32, i32
  }
  func.func @transform_10(%arg0: i32) -> (i32, i32, i32) {
    %c0_i32 = arith.constant 0 : i32
    %c0_i32_0 = arith.constant 0 : i32
    %c0_i32_1 = arith.constant 0 : i32
    return %arg0, %c0_i32, %c0_i32_0 : i32, i32, i32
  }
}

</mosaic_0001>

<llo_original>
// kernel: ffcse_block_pallas.1
$region0: #{ffcse_block_pallas.1}
  #allocation0 [shape = 'u32[]', space=smem, size = 0x4, offset = 0x4, fixed_abs, tag = 'smem constant byte address 0x4 - core index']
  #allocation1 [shape = 'u32[72,128]{1,0:T(1,128)}', space=vmem, size = 0x9000, scoped, tag = 'internal scratch']
  %s0 = inlined_call_operand.vmem [shape: f32[2,16,256], index: 0, kind: input, shape index: {}]
  %s1 = inlined_call_operand.vmem [shape: f32[2,16,256], index: 1, kind: input, shape index: {}]
  %s2 = inlined_call_operand.vmem [shape: f32[2,16], index: 2, kind: input, shape index: {}]
  %s3 = inlined_call_operand.vmem [shape: f32[2,16], index: 3, kind: input, shape index: {}]
  %s4 = inlined_call_operand.vmem [shape: f32[2,1], index: 4, kind: input, shape index: {}]
  %s5 = inlined_call_operand.vmem [shape: f32[16,2], index: 5, kind: input, shape index: {}]
  %s6 = inlined_call_operand.vmem [shape: f32[16,1], index: 6, kind: input, shape index: {}]
  %s7 = inlined_call_operand.vmem [shape: f32[16,2], index: 7, kind: input, shape index: {}]
  %s8 = inlined_call_operand.vmem [shape: f32[16,1], index: 8, kind: input, shape index: {}]
  %s9 = inlined_call_operand.vmem [shape: f32[2,16,256], index: 9, kind: output, shape index: {0}]
  %s10 = inlined_call_operand.vmem [shape: f32[2,16,256], index: 10, kind: output, shape index: {1}]
  %11 = xla_tuple %s9, %s10
  %s12 = sld [smem:[#allocation0]]
  $region77: #{ffcse_block_pallas.1} parent=0
    _
  %s14 = ssub.s32 1, %s12
  %s15 = scalar_select 0, %s14, %s12
  loop: start=0, step=1, limit=4
  $region2: #{ffcse_block_pallas.1} parent=0 // loop_pre_header
    _
  $region3: #{ffcse_block_pallas.1} parent=0 // loop_header
    %s17 = sphi 0, %s21
    %p18 = scmp.ge.s32.totalorder %s17, 4
    %s27 = sphi 0, %s29
    %s30 = sphi 0, %s27
    %s31 = sphi 0, %s30
    %s47 = sphi 0, %s31
    %s53 = sphi 0, %s55
    %s56 = sphi 0, %s53
    %s57 = sphi 0, %s56
    %s73 = sphi 0, %s57
    %s77 = sphi 0, %s77
    %s79 = sphi 0, %s77
    %s80 = sphi 0, %s79
    %s94 = sphi 0, %s80
    %s98 = sphi 0, %s98
    %s100 = sphi 0, %s98
    %s101 = sphi 0, %s100
    %s115 = sphi 0, %s101
    %s119 = sphi 0, %s119
    %s121 = sphi 0, %s119
    %s122 = sphi 0, %s121
    %s136 = sphi 0, %s122
    %s140 = sphi 0, %s140
    %s142 = sphi 0, %s140
    %s143 = sphi 0, %s142
    %s157 = sphi 0, %s143
    %s161 = sphi 0, %s161
    %s163 = sphi 0, %s161
    %s164 = sphi 0, %s163
    %s178 = sphi 0, %s164
    %s182 = sphi 0, %s182
    %s184 = sphi 0, %s182
    %s185 = sphi 0, %s184
    %s199 = sphi 0, %s185
    %s203 = sphi 0, %s203
    %s205 = sphi 0, %s203
    %s206 = sphi 0, %s205
    %s220 = sphi 0, %s206
    %s226 = sphi 0, %s228
    %s229 = sphi 0, %s226
    %s230 = sphi 0, %s229
    %s246 = sphi 0, %s230
    %s252 = sphi 0, %s254
    %s255 = sphi 0, %s252
    %s256 = sphi 0, %s255
    %s272 = sphi 0, %s256
  $region4: #{ffcse_block_pallas.1} parent=0 // loop_header_branch
    %20 = sbr.rel (%p18) target = $region8
  $region5: #{ffcse_block_pallas.1} parent=0 // loop_body
    %s22 = ssub.s32 %s17, 1
    %s23 = ssub.s32 %s17, 2
    %s24 = sadd.s32 %s17, 1
    %s25 = ssub.s32 %s17, %s24
    %p26 = scmp.eq.s32.totalorder %s25, 0
    %s28 = sadd.s32 %s27, 1
    %s29 = scalar_select %p26, %s27, %s28
    %p32 = pneg %p26
    %p33 = scmp.eq.s32.totalorder %s17, 1
    %p34 = por %p32, %p33
    %p35 = scmp.ne.s32.totalorder %s27, %s30
    %p36 = scmp.eq.s32.totalorder %s17, 0
    %p37 = por %p35, %p36
    %p38 = scmp.ne.s32.totalorder %s27, %s30
    %p39 = scmp.eq.s32.totalorder %s22, 1
    %p40 = por %p38, %p39
    %p41 = scmp.ne.s32.totalorder %s30, %s31
    %p42 = scmp.eq.s32.totalorder %s22, 0
    %p43 = por %p41, %p42
    %p44 = scmp.ne.s32.totalorder %s30, %s31
    %p45 = scmp.eq.s32.totalorder %s23, 1
    %p46 = por %p44, %p45
    %p48 = scmp.ne.s32.totalorder %s31, %s47
    %p49 = scmp.eq.s32.totalorder %s23, 0
    %p50 = por %p48, %p49
    %s51 = ssub.s32 %s17, %s24
    %p52 = scmp.eq.s32.totalorder %s51, 0
    %s54 = sadd.s32 %s53, 1
    %s55 = scalar_select %p52, %s53, %s54
    %p58 = pneg %p52
    %p59 = scmp.eq.s32.totalorder %s17, 1
    %p60 = por %p58, %p59
    %p61 = scmp.ne.s32.totalorder %s53, %s56
    %p62 = scmp.eq.s32.totalorder %s17, 0
    %p63 = por %p61, %p62
    %p64 = scmp.ne.s32.totalorder %s53, %s56
    %p65 = scmp.eq.s32.totalorder %s22, 1
    %p66 = por %p64, %p65
    %p67 = scmp.ne.s32.totalorder %s56, %s57
    %p68 = scmp.eq.s32.totalorder %s22, 0
    %p69 = por %p67, %p68
    %p70 = scmp.ne.s32.totalorder %s56, %s57
    %p71 = scmp.eq.s32.totalorder %s23, 1
    %p72 = por %p70, %p71
    %p74 = scmp.ne.s32.totalorder %s57, %s73
    %p75 = scmp.eq.s32.totalorder %s23, 0
    %p76 = por %p74, %p75
    %s78 = sadd.s32 %s77, 1
    %p81 = scmp.eq.s32.totalorder %s17, 1
    %p82 = scmp.ne.s32.totalorder %s77, %s79
    %p83 = scmp.eq.s32.totalorder %s17, 0
    %p84 = por %p82, %p83
    %p85 = scmp.ne.s32.totalorder %s77, %s79
    %p86 = scmp.eq.s32.totalorder %s22, 1
    %p87 = por %p85, %p86
    %p88 = scmp.ne.s32.totalorder %s79, %s80
    %p89 = scmp.eq.s32.totalorder %s22, 0
    %p90 = por %p88, %p89
    %p91 = scmp.ne.s32.totalorder %s79, %s80
    %p92 = scmp.eq.s32.totalorder %s23, 1
    %p93 = por %p91, %p92
    %p95 = scmp.ne.s32.totalorder %s80, %s94
    %p96 = scmp.eq.s32.totalorder %s23, 0
    %p97 = por %p95, %p96
    %s99 = sadd.s32 %s98, 1
    %p102 = scmp.eq.s32.totalorder %s17, 1
    %p103 = scmp.ne.s32.totalorder %s98, %s100
    %p104 = scmp.eq.s32.totalorder %s17, 0
    %p105 = por %p103, %p104
    %p106 = scmp.ne.s32.totalorder %s98, %s100
    %p107 = scmp.eq.s32.totalorder %s22, 1
    %p108 = por %p106, %p107
    %p109 = scmp.ne.s32.totalorder %s100, %s101
    %p110 = scmp.eq.s32.totalorder %s22, 0
    %p111 = por %p109, %p110
    %p112 = scmp.ne.s32.totalorder %s100, %s101
    %p113 = scmp.eq.s32.totalorder %s23, 1
    %p114 = por %p112, %p113
    %p116 = scmp.ne.s32.totalorder %s101, %s115
    %p117 = scmp.eq.s32.totalorder %s23, 0
    %p118 = por %p116, %p117
    %s120 = sadd.s32 %s119, 1
    %p123 = scmp.eq.s32.totalorder %s17, 1
    %p124 = scmp.ne.s32.totalorder %s119, %s121
    %p125 = scmp.eq.s32.totalorder %s17, 0
    %p126 = por %p124, %p125
    %p127 = scmp.ne.s32.totalorder %s119, %s121
    %p128 = scmp.eq.s32.totalorder %s22, 1
    %p129 = por %p127, %p128
    %p130 = scmp.ne.s32.totalorder %s121, %s122
    %p131 = scmp.eq.s32.totalorder %s22, 0
    %p132 = por %p130, %p131
    %p133 = scmp.ne.s32.totalorder %s121, %s122
    %p134 = scmp.eq.s32.totalorder %s23, 1
    %p135 = por %p133, %p134
    %p137 = scmp.ne.s32.totalorder %s122, %s136
    %p138 = scmp.eq.s32.totalorder %s23, 0
    %p139 = por %p137, %p138
    %s141 = sadd.s32 %s140, 1
    %p144 = scmp.eq.s32.totalorder %s17, 1
    %p145 = scmp.ne.s32.totalorder %s140, %s142
    %p146 = scmp.eq.s32.totalorder %s17, 0
    %p147 = por %p145, %p146
    %p148 = scmp.ne.s32.totalorder %s140, %s142
    %p149 = scmp.eq.s32.totalorder %s22, 1
    %p150 = por %p148, %p149
    %p151 = scmp.ne.s32.totalorder %s142, %s143
    %p152 = scmp.eq.s32.totalorder %s22, 0
    %p153 = por %p151, %p152
    %p154 = scmp.ne.s32.totalorder %s142, %s143
    %p155 = scmp.eq.s32.totalorder %s23, 1
    %p156 = por %p154, %p155
    %p158 = scmp.ne.s32.totalorder %s143, %s157
    %p159 = scmp.eq.s32.totalorder %s23, 0
    %p160 = por %p158, %p159
    %s162 = sadd.s32 %s161, 1
    %p165 = scmp.eq.s32.totalorder %s17, 1
    %p166 = scmp.ne.s32.totalorder %s161, %s163
    %p167 = scmp.eq.s32.totalorder %s17, 0
    %p168 = por %p166, %p167
    %p169 = scmp.ne.s32.totalorder %s161, %s163
    %p170 = scmp.eq.s32.totalorder %s22, 1
    %p171 = por %p169, %p170
    %p172 = scmp.ne.s32.totalorder %s163, %s164
    %p173 = scmp.eq.s32.totalorder %s22, 0
    %p174 = por %p172, %p173
    %p175 = scmp.ne.s32.totalorder %s163, %s164
    %p176 = scmp.eq.s32.totalorder %s23, 1
    %p177 = por %p175, %p176
    %p179 = scmp.ne.s32.totalorder %s164, %s178
    %p180 = scmp.eq.s32.totalorder %s23, 0
    %p181 = por %p179, %p180
    %s183 = sadd.s32 %s182, 1
    %p186 = scmp.eq.s32.totalorder %s17, 1
    %p187 = scmp.ne.s32.totalorder %s182, %s184
    %p188 = scmp.eq.s32.totalorder %s17, 0
    %p189 = por %p187, %p188
    %p190 = scmp.ne.s32.totalorder %s182, %s184
    %p191 = scmp.eq.s32.totalorder %s22, 1
    %p192 = por %p190, %p191
    %p193 = scmp.ne.s32.totalorder %s184, %s185
    %p194 = scmp.eq.s32.totalorder %s22, 0
    %p195 = por %p193, %p194
    %p196 = scmp.ne.s32.totalorder %s184, %s185
    %p197 = scmp.eq.s32.totalorder %s23, 1
    %p198 = por %p196, %p197
    %p200 = scmp.ne.s32.totalorder %s185, %s199
    %p201 = scmp.eq.s32.totalorder %s23, 0
    %p202 = por %p200, %p201
    %s204 = sadd.s32 %s203, 1
    %p207 = scmp.eq.s32.totalorder %s17, 1
    %p208 = scmp.ne.s32.totalorder %s203, %s205
    %p209 = scmp.eq.s32.totalorder %s17, 0
    %p210 = por %p208, %p209
    %p211 = scmp.ne.s32.totalorder %s203, %s205
    %p212 = scmp.eq.s32.totalorder %s22, 1
    %p213 = por %p211, %p212
    %p214 = scmp.ne.s32.totalorder %s205, %s206
    %p215 = scmp.eq.s32.totalorder %s22, 0
    %p216 = por %p214, %p215
    %p217 = scmp.ne.s32.totalorder %s205, %s206
    %p218 = scmp.eq.s32.totalorder %s23, 1
    %p219 = por %p217, %p218
    %p221 = scmp.ne.s32.totalorder %s206, %s220
    %p222 = scmp.eq.s32.totalorder %s23, 0
    %p223 = por %p221, %p222
    %s224 = ssub.s32 %s17, %s24
    %p225 = scmp.eq.s32.totalorder %s224, 0
    %s227 = sadd.s32 %s226, 1
    %s228 = scalar_select %p225, %s226, %s227
    %p231 = pneg %p225
    %p232 = scmp.eq.s32.totalorder %s17, 1
    %p233 = por %p231, %p232
    %p234 = scmp.ne.s32.totalorder %s226, %s229
    %p235 = scmp.eq.s32.totalorder %s17, 0
    %p236 = por %p234, %p235
    %p237 = scmp.ne.s32.totalorder %s226, %s229
    %p238 = scmp.eq.s32.totalorder %s22, 1
    %p239 = por %p237, %p238
    %p240 = scmp.ne.s32.totalorder %s229, %s230
    %p241 = scmp.eq.s32.totalorder %s22, 0
    %p242 = por %p240, %p241
    %p243 = scmp.ne.s32.totalorder %s229, %s230
    %p244 = scmp.eq.s32.totalorder %s23, 1
    %p245 = por %p243, %p244
    %p247 = scmp.ne.s32.totalorder %s230, %s246
    %p248 = scmp.eq.s32.totalorder %s23, 0
    %p249 = por %p247, %p248
    %s250 = ssub.s32 %s17, %s24
    %p251 = scmp.eq.s32.totalorder %s250, 0
    %s253 = sadd.s32 %s252, 1
    %s254 = scalar_select %p251, %s252, %s253
    %p257 = pneg %p251
    %p258 = scmp.eq.s32.totalorder %s17, 1
    %p259 = por %p257, %p258
    %p260 = scmp.ne.s32.totalorder %s252, %s255
    %p261 = scmp.eq.s32.totalorder %s17, 0
    %p262 = por %p260, %p261
    %p263 = scmp.ne.s32.totalorder %s252, %s255
    %p264 = scmp.eq.s32.totalorder %s22, 1
    %p265 = por %p263, %p264
    %p266 = scmp.ne.s32.totalorder %s255, %s256
    %p267 = scmp.eq.s32.totalorder %s22, 0
    %p268 = por %p266, %p267
    %p269 = scmp.ne.s32.totalorder %s255, %s256
    %p270 = scmp.eq.s32.totalorder %s23, 1
    %p271 = por %p269, %p270
    %p273 = scmp.ne.s32.totalorder %s256, %s272
    %p274 = scmp.eq.s32.totalorder %s23, 0
    %p275 = por %p273, %p274
    %p276 = scmp.le.s32.totalorder 1, %s17
    %p277 = scmp.lt.s32.totalorder %s17, 3
    %p278 = pnand %p276, %p277
    %p279 = pneg %p278
    // Predicated region
    $region9: #{ffcse_block_pallas.1} parent=5 // pred_check
      _
    $region10: #{ffcse_block_pallas.1} parent=5 // pred_check_branch
      %281 = sbr.rel (%p278) target = $region12
    $region11: #{ffcse_block_pallas.1} parent=5 // pred_region
      %s282 = ssub.s32 %s17, 1
      // Predicated region
      $region13: #{ffcse_block_pallas.1} parent=11 // pred_check
        %p283 = pneg %p90
      $region14: #{ffcse_block_pallas.1} parent=11 // pred_check_branch
        %285 = sbr.rel (%p283) target = $region16
      $region15: #{ffcse_block_pallas.1} parent=11 // pred_region
        _
      $region16: #{ffcse_block_pallas.1} parent=11 // pred_fallthru
        _
      // Predicated region
      $region17: #{ffcse_block_pallas.1} parent=11 // pred_check
        %p286 = pneg %p111
      $region18: #{ffcse_block_pallas.1} parent=11 // pred_check_branch
        %288 = sbr.rel (%p286) target = $region20
      $region19: #{ffcse_block_pallas.1} parent=11 // pred_region
        _
      $region20: #{ffcse_block_pallas.1} parent=11 // pred_fallthru
        _
      // Predicated region
      $region21: #{ffcse_block_pallas.1} parent=11 // pred_check
        %p289 = pneg %p132
      $region22: #{ffcse_block_pallas.1} parent=11 // pred_check_branch
        %291 = sbr.rel (%p289) target = $region24
      $region23: #{ffcse_block_pallas.1} parent=11 // pred_region
        _
      $region24: #{ffcse_block_pallas.1} parent=11 // pred_fallthru
        _
      // Predicated region
      $region25: #{ffcse_block_pallas.1} parent=11 // pred_check
        %p292 = pneg %p153
      $region26: #{ffcse_block_pallas.1} parent=11 // pred_check_branch
        %294 = sbr.rel (%p292) target = $region28
      $region27: #{ffcse_block_pallas.1} parent=11 // pred_region
        _
      $region28: #{ffcse_block_pallas.1} parent=11 // pred_fallthru
        _
      // Predicated region
      $region29: #{ffcse_block_pallas.1} parent=11 // pred_check
        %p295 = pneg %p174
      $region30: #{ffcse_block_pallas.1} parent=11 // pred_check_branch
        %297 = sbr.rel (%p295) target = $region32
      $region31: #{ffcse_block_pallas.1} parent=11 // pred_region
        _
      $region32: #{ffcse_block_pallas.1} parent=11 // pred_fallthru
        _
      // Predicated region
      $region33: #{ffcse_block_pallas.1} parent=11 // pred_check
        %p298 = pneg %p195
      $region34: #{ffcse_block_pallas.1} parent=11 // pred_check_branch
        %300 = sbr.rel (%p298) target = $region36
      $region35: #{ffcse_block_pallas.1} parent=11 // pred_region
        _
      $region36: #{ffcse_block_pallas.1} parent=11 // pred_fallthru
        _
      // Predicated region
      $region37: #{ffcse_block_pallas.1} parent=11 // pred_check
        %p301 = pneg %p216
      $region38: #{ffcse_block_pallas.1} parent=11 // pred_check_branch
        %303 = sbr.rel (%p301) target = $region40
      $region39: #{ffcse_block_pallas.1} parent=11 // pred_region
        _
      $region40: #{ffcse_block_pallas.1} parent=11 // pred_fallthru
        _
    $region12: #{ffcse_block_pallas.1} parent=5 // pred_fallthru
      _
    %p304 = scmp.lt.s32.totalorder %s17, 2
    // Predicated region
    $region41: #{ffcse_block_pallas.1} parent=5 // pred_check
      %p305 = pneg %p304
    $region42: #{ffcse_block_pallas.1} parent=5 // pred_check_branch
      %307 = sbr.rel (%p305) target = $region44
    $region43: #{ffcse_block_pallas.1} parent=5 // pred_region
      // Predicated region
      $region45: #{ffcse_block_pallas.1} parent=43 // pred_check
        %p308 = pneg %p37
      $region46: #{ffcse_block_pallas.1} parent=43 // pred_check_branch
        %310 = sbr.rel (%p308) target = $region48
      $region47: #{ffcse_block_pallas.1} parent=43 // pred_region
        %p311 = scmp.lt.s32.totalorder %s17, 1
        %s312 = scalar_select %p311, %s17, 1
        %s313 = smul.addr %s312, 4
        %s314 = smul.addr %s313, 8
        %s315 = scalar_lea.vmem %s0, %s314
      $region48: #{ffcse_block_pallas.1} parent=43 // pred_fallthru
        _
      // Predicated region
      $region49: #{ffcse_block_pallas.1} parent=43 // pred_check
        %p316 = pneg %p63
      $region50: #{ffcse_block_pallas.1} parent=43 // pred_check_branch
        %318 = sbr.rel (%p316) target = $region52
      $region51: #{ffcse_block_pallas.1} parent=43 // pred_region
        %p319 = scmp.lt.s32.totalorder %s17, 1
        %s320 = scalar_select %p319, %s17, 1
        %s321 = smul.addr %s320, 4
        %s322 = smul.addr %s321, 8
        %s323 = scalar_lea.vmem %s1, %s322
      $region52: #{ffcse_block_pallas.1} parent=43 // pred_fallthru
        _
    $region44: #{ffcse_block_pallas.1} parent=5 // pred_fallthru
      _
    %p324 = scmp.le.s32.totalorder 1, %s17
    %p325 = scmp.lt.s32.totalorder %s17, 3
    %p326 = pnand %p324, %p325
    %p327 = pneg %p326
    // Predicated region
    $region53: #{ffcse_block_pallas.1} parent=5 // pred_check
      _
    $region54: #{ffcse_block_pallas.1} parent=5 // pred_check_branch
      %329 = sbr.rel (%p326) target = $region56
    $region55: #{ffcse_block_pallas.1} parent=5 // pred_region
      %s330 = ssub.s32 %s17, 1
      %p331 = scmp.lt.s32.totalorder %s22, 1
      %s332 = scalar_select %p331, %s22, 1
      %s333 = smul.addr %s332, 4
      %s334 = smul.addr %s333, 8
      %s335 = scalar_lea.vmem %s0, %s334
      %p336 = pneg %p43
      %p337 = pneg %p40
      %p338 = scmp.lt.s32.totalorder %s22, 1
      %s339 = scalar_select %p338, %s22, 1
      %s340 = smul.addr %s339, 4
      %s341 = smul.addr %s340, 8
      %s342 = scalar_lea.vmem %s1, %s341
      %p343 = pneg %p69
      %p344 = pneg %p66
      %p345 = pneg %p90
      %p346 = pneg %p87
      %p347 = pneg %p111
      %p348 = pneg %p108
      %p349 = pneg %p132
      %p350 = pneg %p129
      %p351 = pneg %p153
      %p352 = pneg %p150
      %p353 = pneg %p174
      %p354 = pneg %p171
      %p355 = pneg %p195
      %p356 = pneg %p192
      %p357 = pneg %p216
      %p358 = pneg %p213
      %p359 = pneg %p242
      %p360 = pneg %p239
      %p361 = scmp.lt.s32.totalorder %s22, 1
      %s362 = scalar_select %p361, %s22, 1
      %s363 = smul.addr %s362, 4
      %s364 = smul.addr %s363, 8
      %s365 = scalar_lea.vmem %s9, %s364
      %p366 = pneg %p268
      %p367 = pneg %p265
      %p368 = scmp.lt.s32.totalorder %s22, 1
      %s369 = scalar_select %p368, %s22, 1
      %s370 = smul.addr %s369, 4
      %s371 = smul.addr %s370, 8
      %s372 = scalar_lea.vmem %s10, %s371
      %p373 = scmp.lt.s32.totalorder %s22, 1
      %s374 = scalar_select %p373, %s22, 1
      %s375 = smul.addr %s374, 4
      %s376 = smul.addr %s375, 8
      %s377 = scalar_lea.vmem %s0, %s376
      %p378 = scmp.lt.s32.totalorder %s22, 1
      %s379 = scalar_select %p378, %s22, 1
      %s380 = smul.addr %s379, 4
      %s381 = smul.addr %s380, 8
      %s382 = scalar_lea.vmem %s1, %s381
      %p383 = scmp.lt.s32.totalorder %s22, 1
      %s384 = scalar_select %p383, %s22, 1
      %s385 = smul.addr %s384, 4
      %s386 = smul.addr %s385, 8
      %s387 = scalar_lea.vmem %s9, %s386
      %p388 = scmp.lt.s32.totalorder %s22, 1
      %s389 = scalar_select %p388, %s22, 1
      %s390 = smul.addr %s389, 4
      %s391 = smul.addr %s390, 8
      %s392 = scalar_lea.vmem %s10, %s391
      %v393 = vld [vmem:[%s377] sm:$0xff]
      %v394 = vld [vmem:[%s377 + $0x8] sm:$0xff]
      %v395 = vld [vmem:[%s377 + $0x10] sm:$0xff]
      %v396 = vld [vmem:[%s377 + $0x18] sm:$0xff]
      %v397 = vadd.f32 %v393, %v394
      %398 = vadd.xlane.f32.xlu0 %v397
      %v399 = vpop.xlane.xlu0 %398
      %v400 = vadd.f32 %v395, %v396
      %401 = vadd.xlane.f32.xlu0 %v400
      %v402 = vpop.xlane.xlu0 %401
      %v403 = vld [vmem:[%s382] sm:$0xff]
      %v404 = vld [vmem:[%s382 + $0x8] sm:$0xff]
      %v405 = vld [vmem:[%s382 + $0x10] sm:$0xff]
      %v406 = vld [vmem:[%s382 + $0x18] sm:$0xff]
      %v407 = vadd.f32 %v403, %v404
      %408 = vadd.xlane.f32.xlu0 %v407
      %v409 = vpop.xlane.xlu0 %408
      %v410 = vadd.f32 %v405, %v406
      %411 = vadd.xlane.f32.xlu0 %v410
      %v412 = vpop.xlane.xlu0 %411
      %v413 = vld [vmem:[%s2] sm:$0x3]
      %v414 = vld [vmem:[%s3] sm:$0x3]
      %vm415 = vcmask 130048
      %v417 = vsel %vm415, %v414, 0
      %419 = vmatpush.msra.mxu0 0.0
      %420 = vmatpush.msra.mxu0 0.0
      %421 = vmatpush.msra.mxu0 0.0
      %422 = vmatpush.msra.mxu0 0.0
      %423 = vmatpush.msra.mxu0 0.0
      %424 = vmatpush.msra.mxu0 0.0
      %425 = vmatpush.msra.mxu0 0.0
      %426 = vmatpush.msra.mxu0 0.0
      %427 = vmatpush.msra.mxu0 0.0
      %428 = vmatpush.msra.mxu0 0.0
      %429 = vmatpush.msra.mxu0 0.0
      %430 = vmatpush.msra.mxu0 0.0
      %431 = vmatpush.msra.mxu0 0.0
      %432 = vmatpush.msra.mxu0 0.0
      %433 = vmatpush.msra.mxu0 %v412
      %434 = vmatpush.msra.mxu0 %v409
      %435 = vmatmul.f32.gmra.mxu0 %v417
      %v436 = vpop.f32.mrf.mxu0
      %v437 = vadd.f32 0.0, %v436
      %438 = vdwg.mxu0
      %v440 = vsel %vm415, %v413, 0
      %442 = vmatpush.msra.mxu0 0.0
      %443 = vmatpush.msra.mxu0 0.0
      %444 = vmatpush.msra.mxu0 0.0
      %445 = vmatpush.msra.mxu0 0.0
      %446 = vmatpush.msra.mxu0 0.0
      %447 = vmatpush.msra.mxu0 0.0
      %448 = vmatpush.msra.mxu0 0.0
      %449 = vmatpush.msra.mxu0 0.0
      %450 = vmatpush.msra.mxu0 0.0
      %451 = vmatpush.msra.mxu0 0.0
      %452 = vmatpush.msra.mxu0 0.0
      %453 = vmatpush.msra.mxu0 0.0
      %454 = vmatpush.msra.mxu0 0.0
      %455 = vmatpush.msra.mxu0 0.0
      %456 = vmatpush.msra.mxu0 %v402
      %457 = vmatpush.msra.mxu0 %v399
      %458 = vmatmul.f32.gmra.mxu0 %v440
      %v459 = vpop.f32.mrf.mxu0
      %v460 = vadd.f32 %v437, %v459
      %461 = vdwg.mxu0
      %v462 = vld [vmem:[%s4] sm:$0x3]
      %v463 = vadd.f32 %v460, %v462
      %v464 = vmax.f32 %v463, 0.0
      %v465 = vld [vmem:[%s5] sm:$0xff]
      %v466 = vld [vmem:[%s5 + $0x8] sm:$0xff]
      %v467 = vld [vmem:[%s6] sm:$0xff]
      %v468 = vld [vmem:[%s6 + $0x8] sm:$0xff]
      %vm469 = vcmask 15360
      %v471 = vsel %vm469, %v465, 0
      %v474 = vsel %vm469, %v466, 0
      %vm476 = vcmask 1041408
      %v478 = vsel %vm476, %v464, 0
      %480 = vmatpush.msra.mxu0 0.0
      %481 = vmatpush.msra.mxu0 0.0
      %482 = vmatpush.msra.mxu0 0.0
      %483 = vmatpush.msra.mxu0 0.0
      %484 = vmatpush.msra.mxu0 0.0
      %485 = vmatpush.msra.mxu0 0.0
      %486 = vmatpush.msra.mxu0 0.0
      %487 = vmatpush.msra.mxu0 0.0
      %488 = vmatpush.msra.mxu0 0.0
      %489 = vmatpush.msra.mxu0 0.0
      %490 = vmatpush.msra.mxu0 0.0
      %491 = vmatpush.msra.mxu0 0.0
      %492 = vmatpush.msra.mxu0 0.0
      %493 = vmatpush.msra.mxu0 0.0
      %494 = vmatpush.msra.mxu0 0.0
      %495 = vmatpush.msra.mxu0 %v478
      %496 = vmatmul.f32.gmra.mxu0 %v471
      %v497 = vpop.f32.mrf.mxu0
      %v498 = vadd.f32 %v467, %v497
      %499 = vmatmul.f32.gmra.mxu0 %v474
      %v500 = vpop.f32.mrf.mxu0
      %v501 = vadd.f32 %v468, %v500
      %502 = vdwg.mxu0
      %v503 = vxor.u32 %v498, 2147483648
      %v504 = vxor.u32 %v501, 2147483648
      %v505 = vmul.f32 %v503, 1.442695
      %v506 = vpow.pop %v505
      %v507 = vmul.f32 %v504, 1.442695
      %v508 = vpow.pop %v507
      %v509 = vadd.f32 %v506, 1.0
      %v510 = vadd.f32 %v508, 1.0
      %v511 = vrcp.pop %v509
      %v512 = vmul.f32 %v509, %v511
      %v513 = vsub.f32 1.0, %v512
      %v514 = vmul.f32 %v511, %v513
      %v515 = vadd.f32 %v511, %v514
      %vm516 = vweird.f32 %v509
      %vm517 = vweird.f32 %v511
      %vm518 = vmor %vm516, %vm517
      %v519 = vsel %vm518, %v511, %v515
      %v520 = vand.u32 2147483647, %v509
      %vm521 = vcmp.eq.f32.partialorder %v520, 8.507059e+37
      %v522 = vand.u32 %v509, 2147483648
      %v523 = vor.u32 1.1754944e-38, %v522
      %v524 = vsel %vm521, %v523, %v519
      %v525 = vmul.f32 1.0, %v524
      %v526 = vrcp.pop %v510
      %v527 = vmul.f32 %v510, %v526
      %v528 = vsub.f32 1.0, %v527
      %v529 = vmul.f32 %v526, %v528
      %v530 = vadd.f32 %v526, %v529
      %vm531 = vweird.f32 %v510
      %vm532 = vweird.f32 %v526
      %vm533 = vmor %vm531, %vm532
      %v534 = vsel %vm533, %v526, %v530
      %v535 = vand.u32 2147483647, %v510
      %vm536 = vcmp.eq.f32.partialorder %v535, 8.507059e+37
      %v537 = vand.u32 %v510, 2147483648
      %v538 = vor.u32 1.1754944e-38, %v537
      %v539 = vsel %vm536, %v538, %v534
      %v540 = vmul.f32 1.0, %v539
      %v541 = vld [vmem:[%s7] sm:$0xff]
      %v542 = vld [vmem:[%s7 + $0x8] sm:$0xff]
      %v543 = vld [vmem:[%s8] sm:$0xff]
      %v544 = vld [vmem:[%s8 + $0x8] sm:$0xff]
      %v546 = vsel %vm469, %v541, 0
      %v549 = vsel %vm469, %v542, 0
      %551 = vmatpush.msra.mxu0 0.0
      %552 = vmatpush.msra.mxu0 0.0
      %553 = vmatpush.msra.mxu0 0.0
      %554 = vmatpush.msra.mxu0 0.0
      %555 = vmatpush.msra.mxu0 0.0
      %556 = vmatpush.msra.mxu0 0.0
      %557 = vmatpush.msra.mxu0 0.0
      %558 = vmatpush.msra.mxu0 0.0
      %559 = vmatpush.msra.mxu0 0.0
      %560 = vmatpush.msra.mxu0 0.0
      %561 = vmatpush.msra.mxu0 0.0
      %562 = vmatpush.msra.mxu0 0.0
      %563 = vmatpush.msra.mxu0 0.0
      %564 = vmatpush.msra.mxu0 0.0
      %565 = vmatpush.msra.mxu0 0.0
      %566 = vmatpush.msra.mxu0 %v478
      %567 = vmatmul.f32.gmra.mxu0 %v546
      %v568 = vpop.f32.mrf.mxu0
      %v569 = vadd.f32 %v543, %v568
      %570 = vmatmul.f32.gmra.mxu0 %v549
      %v571 = vpop.f32.mrf.mxu0
      %v572 = vadd.f32 %v544, %v571
      %573 = vdwg.mxu0
      %v574 = vxor.u32 %v569, 2147483648
      %v575 = vxor.u32 %v572, 2147483648
      %v576 = vmul.f32 %v574, 1.442695
      %v577 = vpow.pop %v576
      %v578 = vmul.f32 %v575, 1.442695
      %v579 = vpow.pop %v578
      %v580 = vadd.f32 %v577, 1.0
      %v581 = vadd.f32 %v579, 1.0
      %v582 = vrcp.pop %v580
      %v583 = vmul.f32 %v580, %v582
      %v584 = vsub.f32 1.0, %v583
      %v585 = vmul.f32 %v582, %v584
      %v586 = vadd.f32 %v582, %v585
      %vm587 = vweird.f32 %v580
      %vm588 = vweird.f32 %v582
      %vm589 = vmor %vm587, %vm588
      %v590 = vsel %vm589, %v582, %v586
      %v591 = vand.u32 2147483647, %v580
      %vm592 = vcmp.eq.f32.partialorder %v591, 8.507059e+37
      %v593 = vand.u32 %v580, 2147483648
      %v594 = vor.u32 1.1754944e-38, %v593
      %v595 = vsel %vm592, %v594, %v590
      %v596 = vmul.f32 1.0, %v595
      %v597 = vrcp.pop %v581
      %v598 = vmul.f32 %v581, %v597
      %v599 = vsub.f32 1.0, %v598
      %v600 = vmul.f32 %v597, %v599
      %v601 = vadd.f32 %v597, %v600
      %vm602 = vweird.f32 %v581
      %vm603 = vweird.f32 %v597
      %vm604 = vmor %vm602, %vm603
      %v605 = vsel %vm604, %v597, %v601
      %v606 = vand.u32 2147483647, %v581
      %vm607 = vcmp.eq.f32.partialorder %v606, 8.507059e+37
      %v608 = vand.u32 %v581, 2147483648
      %v609 = vor.u32 1.1754944e-38, %v608
      %v610 = vsel %vm607, %v609, %v605
      %v611 = vmul.f32 1.0, %v610
      %613 = vset.pattern.permute.xlu0 0
      %614 = vperm.xlu0 %613, %v525
      %v615 = vpop.permute.xlu0 %614
      %618 = vset.pattern.permute.xlu0 0
      %619 = vperm.xlu0 %618, %v540
      %v620 = vpop.permute.xlu0 %619
      %v622 = vmul.f32 %v393, %v615
      %v623 = vmul.f32 %v394, %v615
      %v624 = vmul.f32 %v395, %v620
      %v625 = vmul.f32 %v396, %v620
      %626 = vst [vmem:[%s387] sm:$0xff] %v622
      %627 = vst [vmem:[%s387 + $0x8] sm:$0xff] %v623
      %628 = vst [vmem:[%s387 + $0x10] sm:$0xff] %v624
      %629 = vst [vmem:[%s387 + $0x18] sm:$0xff] %v625
      %v630 = vld [vmem:[%s382] sm:$0xff]
      %v631 = vld [vmem:[%s382 + $0x8] sm:$0xff]
      %v632 = vld [vmem:[%s382 + $0x10] sm:$0xff]
      %v633 = vld [vmem:[%s382 + $0x18] sm:$0xff]
      %635 = vset.pattern.permute.xlu0 0
      %636 = vperm.xlu0 %635, %v596
      %v637 = vpop.permute.xlu0 %636
      %640 = vset.pattern.permute.xlu0 0
      %641 = vperm.xlu0 %640, %v611
      %v642 = vpop.permute.xlu0 %641
      %v644 = vmul.f32 %v630, %v637
      %v645 = vmul.f32 %v631, %v637
      %v646 = vmul.f32 %v632, %v642
      %v647 = vmul.f32 %v633, %v642
      %648 = vst [vmem:[%s392] sm:$0xff] %v644
      %649 = vst [vmem:[%s392 + $0x8] sm:$0xff] %v645
      %650 = vst [vmem:[%s392 + $0x10] sm:$0xff] %v646
      %651 = vst [vmem:[%s392 + $0x18] sm:$0xff] %v647
      %p652 = scmp.lt.s32.totalorder %s22, 1
      %s653 = scalar_select %p652, %s22, 1
      %s654 = smul.addr %s653, 4
      %s655 = smul.addr %s654, 8
      %s656 = scalar_lea.vmem %s9, %s655
      %p657 = scmp.lt.s32.totalorder %s22, 1
      %s658 = scalar_select %p657, %s22, 1
      %s659 = smul.addr %s658, 4
      %s660 = smul.addr %s659, 8
      %s661 = scalar_lea.vmem %s10, %s660
      // Predicated region
      $region57: #{ffcse_block_pallas.1} parent=55 // pred_check
        %p662 = pneg %p239
      $region58: #{ffcse_block_pallas.1} parent=55 // pred_check_branch
        %664 = sbr.rel (%p662) target = $region60
      $region59: #{ffcse_block_pallas.1} parent=55 // pred_region
        _
      $region60: #{ffcse_block_pallas.1} parent=55 // pred_fallthru
        _
      // Predicated region
      $region61: #{ffcse_block_pallas.1} parent=55 // pred_check
        %p665 = pneg %p265
      $region62: #{ffcse_block_pallas.1} parent=55 // pred_check_branch
        %667 = sbr.rel (%p665) target = $region64
      $region63: #{ffcse_block_pallas.1} parent=55 // pred_region
        _
      $region64: #{ffcse_block_pallas.1} parent=55 // pred_fallthru
        _
    $region56: #{ffcse_block_pallas.1} parent=5 // pred_fallthru
      _
    %p668 = scmp.le.s32.totalorder 2, %s17
    // Predicated region
    $region65: #{ffcse_block_pallas.1} parent=5 // pred_check
      %p669 = pneg %p668
    $region66: #{ffcse_block_pallas.1} parent=5 // pred_check_branch
      %671 = sbr.rel (%p669) target = $region68
    $region67: #{ffcse_block_pallas.1} parent=5 // pred_region
      %s672 = ssub.s32 %s17, 2
      // Predicated region
      $region69: #{ffcse_block_pallas.1} parent=67 // pred_check
        %p673 = pneg %p245
      $region70: #{ffcse_block_pallas.1} parent=67 // pred_check_branch
        %675 = sbr.rel (%p673) target = $region72
      $region71: #{ffcse_block_pallas.1} parent=67 // pred_region
        %p676 = scmp.lt.s32.totalorder %s23, 1
        %s677 = scalar_select %p676, %s23, 1
        %s678 = smul.addr %s677, 4
        %s679 = smul.addr %s678, 8
        %s680 = scalar_lea.vmem %s9, %s679
      $region72: #{ffcse_block_pallas.1} parent=67 // pred_fallthru
        _
      // Predicated region
      $region73: #{ffcse_block_pallas.1} parent=67 // pred_check
        %p681 = pneg %p271
      $region74: #{ffcse_block_pallas.1} parent=67 // pred_check_branch
        %683 = sbr.rel (%p681) target = $region76
      $region75: #{ffcse_block_pallas.1} parent=67 // pred_region
        %p684 = scmp.lt.s32.totalorder %s23, 1
        %s685 = scalar_select %p684, %s23, 1
        %s686 = smul.addr %s685, 4
        %s687 = smul.addr %s686, 8
        %s688 = scalar_lea.vmem %s10, %s687
      $region76: #{ffcse_block_pallas.1} parent=67 // pred_fallthru
        _
    $region68: #{ffcse_block_pallas.1} parent=5 // pred_fallthru
      _
  $region6: #{ffcse_block_pallas.1} parent=0 // loop_footer
    %s21 = sadd.s32 1, %s17
  $region7: #{ffcse_block_pallas.1} parent=0 // loop_footer_branch
    %16 = sbr.rel target = $region3
  $region8: #{ffcse_block_pallas.1} parent=0 // loop_exit
    _

</llo_original>
